<compile_context>
chip_gen: v5e
topology: v5e:2x2
jax: 0.10.0
libtpu: 0.0.40
codegen_flags: <defaults>
</compile_context>

<pallas_src>
import jax
import jax.numpy as jnp
from jax.experimental import pallas as pl
from jax.experimental.pallas import tpu as pltpu


def _round_up(x, m):
    return ((x + m - 1) // m) * m


def _padded_vmem_bytes(shape, dtype):
    """Rough VMEM footprint of a 2-D array after (sublane, 128-lane) tiling."""
    r, c = shape
    it = jnp.dtype(dtype).itemsize
    sub = {4: 8, 2: 16, 1: 32}.get(it, 8)
    return _round_up(r, sub) * _round_up(c, 128) * it


def _block_diag_t(w):
    """[d, m_in, m_out] -> TRANSPOSED block-diagonal [d*m_out, d*m_in] with feature j's
    (m_out x m_in) block at rows j*m_out, cols j*m_in, so that W_bd_T @ h^T reproduces
    the per-feature LocallyConnected matmul of the PyTorch module."""
    d, m_in, m_out = w.shape
    eye = jnp.eye(d, dtype=w.dtype)
    wbd = jnp.einsum("jko,jl->jolk", w, eye)          # [d, m_out, d, m_in]
    return wbd.reshape(d * m_out, d * m_in)


def _make_kernel(num_lc, use_vpu_fc1, approx_recip):
    """Fused forward kernel (transposed): fc1 (pre-combined) + num_lc block-diag LC."""

    def kernel(*refs):
        xT_ref, w1_ref, b1_ref = refs[:3]
        lc_refs = refs[3:3 + 2 * num_lc]
        o_ref = refs[3 + 2 * num_lc]

        xT = xT_ref[...]                              # [d, tn]      f32, batch in lanes
        w1 = w1_ref[...]                              # [d*m1, d]
        b1 = b1_ref[...]                              # [d*m1, 1]    f32
        d = w1.shape[1]

        # fc1_pos(x) - fc1_neg(x), transposed:  h^T = (Wp - Wn) @ x^T + (bp - bn)
        if use_vpu_fc1:
            # K = d is tiny: d broadcast FMAs on the VPU, skip the MXU round-trip.
            h = b1 + w1[:, 0:1] * xT[0:1, :]
            for k in range(1, d):
                h = h + w1[:, k:k + 1] * xT[k:k + 1, :]
        else:
            h = jnp.dot(w1, xT.astype(w1.dtype),
                        preferred_element_type=jnp.float32) + b1      # [d*m1, tn] f32

        # LocallyConnected layers fused as block-diagonal matmuls (lane-dense output).
        for l in range(num_lc):
            w_bd_t = lc_refs[2 * l][...]              # [d*m_out, d*m_in]
            b = lc_refs[2 * l + 1][...]               # [d*m_out, 1]  f32
            z = 1.0 + jnp.exp(-h)                     # f32; exp goes to the EUP slot
            s = pl.reciprocal(z, approx=True) if approx_recip else 1.0 / z
            h = jnp.dot(w_bd_t, s.astype(w_bd_t.dtype),
                        preferred_element_type=jnp.float32) + b       # [d*m_out, tn]

        # last layer has m_out == 1, so h is [d, tn]  (== squeeze(dim=2), transposed)
        o_ref[...] = h.astype(o_ref.dtype)

    return kernel


def notears_mlp_forward(x, params, dims, *, tn=1024, use_bf16=True):
    """Pallas forward pass of NotearsMLP. x: [N, d] -> [N, d]."""
    n, d = x.shape
    m1 = dims[1]
    num_lc = len(dims) - 2
    assert len(dims) >= 2 and dims[-1] == 1 and d == dims[0]

    mm_dtype = jnp.bfloat16 if use_bf16 else jnp.float32
    use_vpu_fc1 = d <= 8          # K = d contraction on the VPU when the MXU would be ~empty

    # ---- hoisted parameter prep (one-time XLA ops) ----
    w1 = (params["fc1_pos_w"] - params["fc1_neg_w"]).astype(
        jnp.float32 if use_vpu_fc1 else mm_dtype)                      # [d*m1, d]
    b1 = (params["fc1_pos_b"] - params["fc1_neg_b"]).reshape(d * m1, 1).astype(jnp.float32)

    lc_args, lc_shapes, lc_dtypes = [], [], []
    for l in range(num_lc):
        m_in, m_out = dims[l + 1], dims[l + 2]
        w_bd_t = _block_diag_t(params[f"fc2_{l}_w"]).astype(mm_dtype)  # [d*m_out, d*m_in]
        b_fl = params[f"fc2_{l}_b"].reshape(d * m_out, 1).astype(jnp.float32)
        lc_args += [w_bd_t, b_fl]
        lc_shapes += [(d * m_out, d * m_in), (d * m_out, 1)]
        lc_dtypes += [mm_dtype, jnp.float32]

    # ---- batch tiling: lane-dense tiles (multiple of 128), even grid >= 2 if possible ----
    if n <= 128:
        g, tn_eff = 1, 128
    else:
        tn_cap = max(128, _round_up(min(tn, 2048), 128))
        g = 2 * max(1, pl.cdiv(n, 2 * tn_cap))        # even grid >= 2 (v7x dual-TC balance)
        tn_eff = _round_up(pl.cdiv(n, g), 128)
    n_pad = g * tn_eff

    xT = x.astype(jnp.float32).T                      # [d, n] transpose in the XLA wrapper
    if n_pad != n:
        xT = jnp.pad(xT, ((0, 0), (0, n_pad - n)))

    # ---- VMEM budget (v7x: 64 MiB physical per TensorCore) ----
    weight_list = [(tuple(w1.shape), w1.dtype), (tuple(b1.shape), jnp.float32)] + \
                  list(zip(lc_shapes, lc_dtypes))
    weight_bytes = sum(_padded_vmem_bytes(s, dt) for s, dt in weight_list)
    io_bytes = _padded_vmem_bytes((d, tn_eff), jnp.float32) + \
               _padded_vmem_bytes((d, tn_eff), x.dtype)
    layer_widths = [d * m1] + [d * dims[l + 2] for l in range(num_lc)]
    interm_bytes = sum(_padded_vmem_bytes((w, tn_eff), jnp.float32) for w in layer_widths)
    vmem_needed = 2 * weight_bytes + 2 * io_bytes + 3 * interm_bytes + (2 << 20)
    vmem_budget = 60 * 2**20
    assert vmem_needed <= vmem_budget, (
        f"resident weights/tiles need ~{vmem_needed >> 20} MiB VMEM (> {vmem_budget >> 20} MiB "
        "v7x budget); tile the block-diagonal LC weights over feature groups for this d.")
    vmem_limit = int(min(max(2 * vmem_needed, 32 * 2**20), 64 * 2**20))

    # ---- cost estimate (kernel is small & launch-bound; helps XLA scheduling) ----
    flops_per_row = 2 * d * (d * m1)
    for l in range(num_lc):
        flops_per_row += 2 * (d * dims[l + 1]) * (d * dims[l + 2])
    trans_per_row = sum(d * dims[l + 1] for l in range(num_lc))
    weight_raw_bytes = sum(s[0] * s[1] * jnp.dtype(dt).itemsize for s, dt in weight_list)
    cost = pl.CostEstimate(
        flops=int(n_pad * flops_per_row),
        transcendentals=int(n_pad * trans_per_row),
        bytes_accessed=int(n_pad * d * 4 + n_pad * d * jnp.dtype(x.dtype).itemsize
                           + weight_raw_bytes),
    )

    in_specs = [
        pl.BlockSpec((d, tn_eff), lambda i: (0, i)),              # x^T tiled over lanes (batch)
        pl.BlockSpec(tuple(w1.shape), lambda i: (0, 0)),          # combined fc1 weight (resident)
        pl.BlockSpec(tuple(b1.shape), lambda i: (0, 0)),          # combined fc1 bias
    ]
    for shp in lc_shapes:
        in_specs.append(pl.BlockSpec(shp, lambda i: (0, 0)))      # resident LC weights/biases

    outT = pl.pallas_call(
        _make_kernel(num_lc, use_vpu_fc1, approx_recip=use_bf16),
        out_shape=jax.ShapeDtypeStruct((d, n_pad), x.dtype),
        grid_spec=pltpu.PrefetchScalarGridSpec(
            num_scalar_prefetch=0,
            grid=(g,),
            in_specs=in_specs,
            out_specs=pl.BlockSpec((d, tn_eff), lambda i: (0, i)),
        ),
        compiler_params=pltpu.CompilerParams(
            dimension_semantics=("parallel",),
            vmem_limit_bytes=vmem_limit),
        cost_estimate=cost,
    )(xT, w1, b1, *lc_args)

    out = outT.T                                                  # [n_pad, d] back in XLA
    return out[:n] if n_pad != n else out


def init_params(key, dims):
    """Deterministic synthetic parameters matching NotearsMLP.__init__ shapes."""
    d, m1 = dims[0], dims[1]
    num_lc = len(dims) - 2
    keys = jax.random.split(key, 4 + 2 * num_lc)
    params = {
        "fc1_pos_w": jax.random.uniform(keys[0], (d * m1, d), jnp.float32, 0.0, 0.2),
        "fc1_neg_w": jax.random.uniform(keys[1], (d * m1, d), jnp.float32, 0.0, 0.2),
        "fc1_pos_b": jax.random.uniform(keys[2], (d * m1,), jnp.float32, -0.1, 0.1),
        "fc1_neg_b": jax.random.uniform(keys[3], (d * m1,), jnp.float32, -0.1, 0.1),
    }
    for l in range(num_lc):
        m_in, m_out = dims[l + 1], dims[l + 2]
        params[f"fc2_{l}_w"] = jax.random.uniform(
            keys[4 + 2 * l], (d, m_in, m_out), jnp.float32, -0.3, 0.3)
        params[f"fc2_{l}_b"] = jax.random.uniform(
            keys[5 + 2 * l], (d, m_out), jnp.float32, -0.1, 0.1)
    return params


def reference_forward(x, params, dims):
    """Pure-JAX f32 reference reproducing the PyTorch forward exactly."""
    d, m1 = dims[0], dims[1]
    h = x @ (params["fc1_pos_w"] - params["fc1_neg_w"]).T \
        + (params["fc1_pos_b"] - params["fc1_neg_b"])
    h = h.reshape(-1, d, m1)                                      # view(-1, d, m1)
    for l in range(len(dims) - 2):
        h = jax.nn.sigmoid(h)
        w = params[f"fc2_{l}_w"]                                  # [d, m_in, m_out]
        b = params[f"fc2_{l}_b"]                                  # [d, m_out]
        h = jnp.einsum("njm,jmo->njo", h, w) + b[None, :, :]      # LocallyConnected
    return h[:, :, 0]                                             # squeeze(dim=2)


if __name__ == "__main__":
    # dims = [d, m1, m2, 1]  -> fc1 + two LocallyConnected layers
    dims = [4, 16, 8, 1]
    n = 512   # grid of 2 lane-dense tiles (both v7x TensorCores busy)

    key = jax.random.PRNGKey(0)
    kx, kp = jax.random.split(key)
    x = jax.random.normal(kx, (n, dims[0]), jnp.float32)
    params = init_params(kp, dims)
    ref = reference_forward(x, params, dims)

    # 1) f32 path (exact sigmoid / exact divide): tight check against the JAX reference.
    out_f32 = jax.block_until_ready(notears_mlp_forward(x, params, dims, use_bf16=False))
    assert out_f32.shape == (n, dims[0])
    assert jnp.allclose(out_f32, ref, rtol=1e-4, atol=1e-4), (
        f"f32 max abs err {jnp.max(jnp.abs(out_f32 - ref))}")

    # 2) bf16-matmul fast path (f32 accumulation, approx EUP reciprocal), looser tolerance.
    #    NOTE: bf16 cast of (fc1_pos - fc1_neg) loses relative accuracy on near-cancelling
    #    weights; fine for the forward benchmark, not for acyclicity/gradient computations.
    out_bf16 = jax.block_until_ready(notears_mlp_forward(x, params, dims, use_bf16=True))
    assert out_bf16.shape == (n, dims[0])
    assert jnp.allclose(out_bf16, ref, rtol=5e-2, atol=5e-2), (
        f"bf16 max abs err {jnp.max(jnp.abs(out_bf16 - ref))}")

    # 3) non-multiple batch (exercises the lane-padded tail path).
    out_tail = jax.block_until_ready(notears_mlp_forward(x[:300], params, dims, use_bf16=False))
    assert out_tail.shape == (300, dims[0])
    assert jnp.allclose(out_tail, ref[:300], rtol=1e-4, atol=1e-4)

    print("KERNEL_OK")
</pallas_src>

<mosaic_0001>
module attributes {stable_mosaic.version = 11 : i64} {
  func.func @kernel(%arg0: i32, %arg1: memref<4x256xf32, #tpu.memory_space<vmem>>, %arg2: memref<64x4xf32, #tpu.memory_space<vmem>>, %arg3: memref<64x1xf32, #tpu.memory_space<vmem>>, %arg4: memref<32x64xf32, #tpu.memory_space<vmem>>, %arg5: memref<32x1xf32, #tpu.memory_space<vmem>>, %arg6: memref<4x32xf32, #tpu.memory_space<vmem>>, %arg7: memref<4x1xf32, #tpu.memory_space<vmem>>, %arg8: memref<4x256xf32, #tpu.memory_space<vmem>>) attributes {dimension_semantics = [#tpu.dimension_semantics<parallel>], iteration_bounds = array<i64: 2>, scalar_prefetch = 0 : i64, scratch_operands = 0 : i64, tpu.core_type = #tpu.core_type<tc>, window_params = [{transform_indices = @transform_0, window_bounds = array<i64: 4, 256>}, {pipeline_mode = #tpu.pipeline_mode<synchronous>, transform_indices = @transform_1, window_bounds = array<i64: 64, 4>}, {pipeline_mode = #tpu.pipeline_mode<synchronous>, transform_indices = @transform_2, window_bounds = array<i64: 64, 1>}, {pipeline_mode = #tpu.pipeline_mode<synchronous>, transform_indices = @transform_3, window_bounds = array<i64: 32, 64>}, {pipeline_mode = #tpu.pipeline_mode<synchronous>, transform_indices = @transform_4, window_bounds = array<i64: 32, 1>}, {pipeline_mode = #tpu.pipeline_mode<synchronous>, transform_indices = @transform_5, window_bounds = array<i64: 4, 32>}, {pipeline_mode = #tpu.pipeline_mode<synchronous>, transform_indices = @transform_6, window_bounds = array<i64: 4, 1>}, {transform_indices = @transform_7, window_bounds = array<i64: 4, 256>}]} {
    %c0 = arith.constant 0 : index
    %c0_0 = arith.constant 0 : index
    %0 = vector.load %arg1[%c0, %c0_0] : memref<4x256xf32, #tpu.memory_space<vmem>>, vector<4x256xf32>
    %c0_1 = arith.constant 0 : index
    %c0_2 = arith.constant 0 : index
    %1 = vector.load %arg2[%c0_1, %c0_2] : memref<64x4xf32, #tpu.memory_space<vmem>>, vector<64x4xf32>
    %c0_3 = arith.constant 0 : index
    %c0_4 = arith.constant 0 : index
    %2 = vector.load %arg3[%c0_3, %c0_4] : memref<64x1xf32, #tpu.memory_space<vmem>>, vector<64x1xf32>
    %3 = vector.extract_strided_slice %1 {offsets = [0, 0], sizes = [64, 1], strides = [1, 1]} : vector<64x4xf32> to vector<64x1xf32>
    %4 = vector.extract_strided_slice %0 {offsets = [0, 0], sizes = [1, 256], strides = [1, 1]} : vector<4x256xf32> to vector<1x256xf32>
    %5 = vector.broadcast %3 : vector<64x1xf32> to vector<64x256xf32>
    %6 = vector.broadcast %4 : vector<1x256xf32> to vector<64x256xf32>
    %7 = arith.mulf %5, %6 : vector<64x256xf32>
    %8 = vector.broadcast %2 : vector<64x1xf32> to vector<64x256xf32>
    %9 = arith.addf %8, %7 : vector<64x256xf32>
    %10 = vector.extract_strided_slice %1 {offsets = [0, 1], sizes = [64, 1], strides = [1, 1]} : vector<64x4xf32> to vector<64x1xf32>
    %11 = vector.extract_strided_slice %0 {offsets = [1, 0], sizes = [1, 256], strides = [1, 1]} : vector<4x256xf32> to vector<1x256xf32>
    %12 = vector.broadcast %10 : vector<64x1xf32> to vector<64x256xf32>
    %13 = vector.broadcast %11 : vector<1x256xf32> to vector<64x256xf32>
    %14 = arith.mulf %12, %13 : vector<64x256xf32>
    %15 = arith.addf %9, %14 : vector<64x256xf32>
    %16 = vector.extract_strided_slice %1 {offsets = [0, 2], sizes = [64, 1], strides = [1, 1]} : vector<64x4xf32> to vector<64x1xf32>
    %17 = vector.extract_strided_slice %0 {offsets = [2, 0], sizes = [1, 256], strides = [1, 1]} : vector<4x256xf32> to vector<1x256xf32>
    %18 = vector.broadcast %16 : vector<64x1xf32> to vector<64x256xf32>
    %19 = vector.broadcast %17 : vector<1x256xf32> to vector<64x256xf32>
    %20 = arith.mulf %18, %19 : vector<64x256xf32>
    %21 = arith.addf %15, %20 : vector<64x256xf32>
    %22 = vector.extract_strided_slice %1 {offsets = [0, 3], sizes = [64, 1], strides = [1, 1]} : vector<64x4xf32> to vector<64x1xf32>
    %23 = vector.extract_strided_slice %0 {offsets = [3, 0], sizes = [1, 256], strides = [1, 1]} : vector<4x256xf32> to vector<1x256xf32>
    %24 = vector.broadcast %22 : vector<64x1xf32> to vector<64x256xf32>
    %25 = vector.broadcast %23 : vector<1x256xf32> to vector<64x256xf32>
    %26 = arith.mulf %24, %25 : vector<64x256xf32>
    %27 = arith.addf %21, %26 : vector<64x256xf32>
    %c0_5 = arith.constant 0 : index
    %c0_6 = arith.constant 0 : index
    %28 = vector.load %arg4[%c0_5, %c0_6] : memref<32x64xf32, #tpu.memory_space<vmem>>, vector<32x64xf32>
    %c0_7 = arith.constant 0 : index
    %c0_8 = arith.constant 0 : index
    %29 = vector.load %arg5[%c0_7, %c0_8] : memref<32x1xf32, #tpu.memory_space<vmem>>, vector<32x1xf32>
    %cst = arith.constant 0.000000e+00 : f32
    %30 = vector.broadcast %cst : f32 to vector<64x256xf32>
    %31 = arith.subf %30, %27 : vector<64x256xf32>
    %32 = math.exp %31 : vector<64x256xf32>
    %cst_9 = arith.constant 1.000000e+00 : f32
    %33 = vector.broadcast %cst_9 : f32 to vector<64x256xf32>
    %34 = arith.addf %33, %32 : vector<64x256xf32>
    %cst_10 = arith.constant 1.000000e+00 : f32
    %35 = vector.broadcast %cst_10 : f32 to vector<64x256xf32>
    %36 = arith.divf %35, %34 : vector<64x256xf32>
    %cst_11 = arith.constant dense<0.000000e+00> : vector<32x256xf32>
    %37 = tpu.matmul %28, %36, %cst_11 {dimension_numbers = #tpu.dot_dimension_numbers<[1], [0], [0], [1], [0, 0, 1, 1], [], []>} : vector<32x64xf32>, vector<64x256xf32>, vector<32x256xf32> -> vector<32x256xf32>
    %38 = vector.broadcast %29 : vector<32x1xf32> to vector<32x256xf32>
    %39 = arith.addf %37, %38 : vector<32x256xf32>
    %c0_12 = arith.constant 0 : index
    %c0_13 = arith.constant 0 : index
    %40 = vector.load %arg6[%c0_12, %c0_13] : memref<4x32xf32, #tpu.memory_space<vmem>>, vector<4x32xf32>
    %c0_14 = arith.constant 0 : index
    %c0_15 = arith.constant 0 : index
    %41 = vector.load %arg7[%c0_14, %c0_15] : memref<4x1xf32, #tpu.memory_space<vmem>>, vector<4x1xf32>
    %cst_16 = arith.constant 0.000000e+00 : f32
    %42 = vector.broadcast %cst_16 : f32 to vector<32x256xf32>
    %43 = arith.subf %42, %39 : vector<32x256xf32>
    %44 = math.exp %43 : vector<32x256xf32>
    %cst_17 = arith.constant 1.000000e+00 : f32
    %45 = vector.broadcast %cst_17 : f32 to vector<32x256xf32>
    %46 = arith.addf %45, %44 : vector<32x256xf32>
    %cst_18 = arith.constant 1.000000e+00 : f32
    %47 = vector.broadcast %cst_18 : f32 to vector<32x256xf32>
    %48 = arith.divf %47, %46 : vector<32x256xf32>
    %cst_19 = arith.constant dense<0.000000e+00> : vector<4x256xf32>
    %49 = tpu.matmul %40, %48, %cst_19 {dimension_numbers = #tpu.dot_dimension_numbers<[1], [0], [0], [1], [0, 0, 1, 1], [], []>} : vector<4x32xf32>, vector<32x256xf32>, vector<4x256xf32> -> vector<4x256xf32>
    %50 = vector.broadcast %41 : vector<4x1xf32> to vector<4x256xf32>
    %51 = arith.addf %49, %50 : vector<4x256xf32>
    %c0_20 = arith.constant 0 : index
    %c0_21 = arith.constant 0 : index
    %52 = vector.load %arg8[%c0_20, %c0_21] : memref<4x256xf32, #tpu.memory_space<vmem>>, vector<4x256xf32>
    tpu.vector_store %arg8[%c0_20, %c0_21], %51 {strides = array<i32>} : memref<4x256xf32, #tpu.memory_space<vmem>>, vector<4x256xf32>,
    return
  }
  func.func @transform_0(%arg0: i32) -> (i32, i32) {
    %c0_i32 = arith.constant 0 : i32
    %c0_i32_0 = arith.constant 0 : i32
    return %c0_i32, %arg0 : i32, i32
  }
  func.func @transform_1(%arg0: i32) -> (i32, i32) {
    %c0_i32 = arith.constant 0 : i32
    %c0_i32_0 = arith.constant 0 : i32
    %c0_i32_1 = arith.constant 0 : i32
    return %c0_i32, %c0_i32_0 : i32, i32
  }
  func.func @transform_2(%arg0: i32) -> (i32, i32) {
    %c0_i32 = arith.constant 0 : i32
    %c0_i32_0 = arith.constant 0 : i32
    %c0_i32_1 = arith.constant 0 : i32
    return %c0_i32, %c0_i32_0 : i32, i32
  }
  func.func @transform_3(%arg0: i32) -> (i32, i32) {
    %c0_i32 = arith.constant 0 : i32
    %c0_i32_0 = arith.constant 0 : i32
    %c0_i32_1 = arith.constant 0 : i32
    return %c0_i32, %c0_i32_0 : i32, i32
  }
  func.func @transform_4(%arg0: i32) -> (i32, i32) {
    %c0_i32 = arith.constant 0 : i32
    %c0_i32_0 = arith.constant 0 : i32
    %c0_i32_1 = arith.constant 0 : i32
    return %c0_i32, %c0_i32_0 : i32, i32
  }
  func.func @transform_5(%arg0: i32) -> (i32, i32) {
    %c0_i32 = arith.constant 0 : i32
    %c0_i32_0 = arith.constant 0 : i32
    %c0_i32_1 = arith.constant 0 : i32
    return %c0_i32, %c0_i32_0 : i32, i32
  }
  func.func @transform_6(%arg0: i32) -> (i32, i32) {
    %c0_i32 = arith.constant 0 : i32
    %c0_i32_0 = arith.constant 0 : i32
    %c0_i32_1 = arith.constant 0 : i32
    return %c0_i32, %c0_i32_0 : i32, i32
  }
  func.func @transform_7(%arg0: i32) -> (i32, i32) {
    %c0_i32 = arith.constant 0 : i32
    %c0_i32_0 = arith.constant 0 : i32
    return %c0_i32, %arg0 : i32, i32
  }
}

</mosaic_0001>

<llo_original>
// kernel: tpu_custom_call.1
$region0: #{tpu_custom_call.1}
  #allocation0 [shape = 'u32[]', space=smem, size = 0x4, offset = 0x4, fixed_abs, tag = 'smem constant byte address 0x4 - core index']
  #allocation1 [shape = 'u32[72,128]{1,0:T(1,128)}', space=vmem, size = 0x9000, scoped, tag = 'internal scratch']
  %s0 = inlined_call_operand.vmem [shape: f32[4,512], index: 0, kind: input, shape index: {}]
  %s1 = inlined_call_operand.vmem [shape: f32[64,4], index: 1, kind: input, shape index: {}]
  %s2 = inlined_call_operand.vmem [shape: f32[64,1], index: 2, kind: input, shape index: {}]
  %s3 = inlined_call_operand.vmem [shape: f32[32,64], index: 3, kind: input, shape index: {}]
  %s4 = inlined_call_operand.vmem [shape: f32[32,1], index: 4, kind: input, shape index: {}]
  %s5 = inlined_call_operand.vmem [shape: f32[4,32], index: 5, kind: input, shape index: {}]
  %s6 = inlined_call_operand.vmem [shape: f32[4,1], index: 6, kind: input, shape index: {}]
  %s7 = inlined_call_operand.hbm [shape: f32[4,512], index: 7, kind: output, shape index: {}]
  %s8 = sld [smem:[#allocation0]]
  $region61: #{tpu_custom_call.1} parent=0
    _
  %s10 = ssub.s32 1, %s8
  %s11 = scalar_select 0, %s10, %s8
  $region1: #{tpu_custom_call.1} parent=0
    #allocation2 [shape = 'u8[8192]{0}', space=vmem, size = 0x2000, scoped, tag = 'output window, operand 0']
    #allocation3 [shape = 's32[2]{0}', space=sflag, size = 0x8, scoped, tag = 'scoped memory for tpu_custom_call.1']
    %12 = vsyncpa [#allocation3], 0
    %s13 = scalar_lea.sflag [#allocation3], 1
    %14 = vsyncpa %s13, 0
    loop: start=0, step=1, limit=4
    $region2: #{tpu_custom_call.1} parent=1 // loop_pre_header
      _
    $region3: #{tpu_custom_call.1} parent=1 // loop_header
      %s16 = sphi 0, %s20
      %p17 = scmp.ge.s32.totalorder %s16, 4
      %s26 = sphi 0, %s28
      %s29 = sphi 0, %s26
      %s30 = sphi 0, %s29
      %s46 = sphi 0, %s30
      %s50 = sphi 0, %s50
      %s52 = sphi 0, %s50
      %s53 = sphi 0, %s52
      %s67 = sphi 0, %s53
      %s71 = sphi 0, %s71
      %s73 = sphi 0, %s71
      %s74 = sphi 0, %s73
      %s88 = sphi 0, %s74
      %s92 = sphi 0, %s92
      %s94 = sphi 0, %s92
      %s95 = sphi 0, %s94
      %s109 = sphi 0, %s95
      %s113 = sphi 0, %s113
      %s115 = sphi 0, %s113
      %s116 = sphi 0, %s115
      %s130 = sphi 0, %s116
      %s134 = sphi 0, %s134
      %s136 = sphi 0, %s134
      %s137 = sphi 0, %s136
      %s151 = sphi 0, %s137
      %s155 = sphi 0, %s155
      %s157 = sphi 0, %s155
      %s158 = sphi 0, %s157
      %s172 = sphi 0, %s158
      %s178 = sphi 0, %s180
      %s181 = sphi 0, %s178
      %s182 = sphi 0, %s181
      %s198 = sphi 0, %s182
    $region4: #{tpu_custom_call.1} parent=1 // loop_header_branch
      %19 = sbr.rel (%p17) target = $region8
    $region5: #{tpu_custom_call.1} parent=1 // loop_body
      %s21 = ssub.s32 %s16, 1
      %s22 = ssub.s32 %s16, 2
      %s23 = sadd.s32 %s16, 1
      %s24 = ssub.s32 %s16, %s23
      %p25 = scmp.eq.s32.totalorder %s24, 0
      %s27 = sadd.s32 %s26, 1
      %s28 = scalar_select %p25, %s26, %s27
      %p31 = pneg %p25
      %p32 = scmp.eq.s32.totalorder %s16, 1
      %p33 = por %p31, %p32
      %p34 = scmp.ne.s32.totalorder %s26, %s29
      %p35 = scmp.eq.s32.totalorder %s16, 0
      %p36 = por %p34, %p35
      %p37 = scmp.ne.s32.totalorder %s26, %s29
      %p38 = scmp.eq.s32.totalorder %s21, 1
      %p39 = por %p37, %p38
      %p40 = scmp.ne.s32.totalorder %s29, %s30
      %p41 = scmp.eq.s32.totalorder %s21, 0
      %p42 = por %p40, %p41
      %p43 = scmp.ne.s32.totalorder %s29, %s30
      %p44 = scmp.eq.s32.totalorder %s22, 1
      %p45 = por %p43, %p44
      %p47 = scmp.ne.s32.totalorder %s30, %s46
      %p48 = scmp.eq.s32.totalorder %s22, 0
      %p49 = por %p47, %p48
      %s51 = sadd.s32 %s50, 1
      %p54 = scmp.eq.s32.totalorder %s16, 1
      %p55 = scmp.ne.s32.totalorder %s50, %s52
      %p56 = scmp.eq.s32.totalorder %s16, 0
      %p57 = por %p55, %p56
      %p58 = scmp.ne.s32.totalorder %s50, %s52
      %p59 = scmp.eq.s32.totalorder %s21, 1
      %p60 = por %p58, %p59
      %p61 = scmp.ne.s32.totalorder %s52, %s53
      %p62 = scmp.eq.s32.totalorder %s21, 0
      %p63 = por %p61, %p62
      %p64 = scmp.ne.s32.totalorder %s52, %s53
      %p65 = scmp.eq.s32.totalorder %s22, 1
      %p66 = por %p64, %p65
      %p68 = scmp.ne.s32.totalorder %s53, %s67
      %p69 = scmp.eq.s32.totalorder %s22, 0
      %p70 = por %p68, %p69
      %s72 = sadd.s32 %s71, 1
      %p75 = scmp.eq.s32.totalorder %s16, 1
      %p76 = scmp.ne.s32.totalorder %s71, %s73
      %p77 = scmp.eq.s32.totalorder %s16, 0
      %p78 = por %p76, %p77
      %p79 = scmp.ne.s32.totalorder %s71, %s73
      %p80 = scmp.eq.s32.totalorder %s21, 1
      %p81 = por %p79, %p80
      %p82 = scmp.ne.s32.totalorder %s73, %s74
      %p83 = scmp.eq.s32.totalorder %s21, 0
      %p84 = por %p82, %p83
      %p85 = scmp.ne.s32.totalorder %s73, %s74
      %p86 = scmp.eq.s32.totalorder %s22, 1
      %p87 = por %p85, %p86
      %p89 = scmp.ne.s32.totalorder %s74, %s88
      %p90 = scmp.eq.s32.totalorder %s22, 0
      %p91 = por %p89, %p90
      %s93 = sadd.s32 %s92, 1
      %p96 = scmp.eq.s32.totalorder %s16, 1
      %p97 = scmp.ne.s32.totalorder %s92, %s94
      %p98 = scmp.eq.s32.totalorder %s16, 0
      %p99 = por %p97, %p98
      %p100 = scmp.ne.s32.totalorder %s92, %s94
      %p101 = scmp.eq.s32.totalorder %s21, 1
      %p102 = por %p100, %p101
      %p103 = scmp.ne.s32.totalorder %s94, %s95
      %p104 = scmp.eq.s32.totalorder %s21, 0
      %p105 = por %p103, %p104
      %p106 = scmp.ne.s32.totalorder %s94, %s95
      %p107 = scmp.eq.s32.totalorder %s22, 1
      %p108 = por %p106, %p107
      %p110 = scmp.ne.s32.totalorder %s95, %s109
      %p111 = scmp.eq.s32.totalorder %s22, 0
      %p112 = por %p110, %p111
      %s114 = sadd.s32 %s113, 1
      %p117 = scmp.eq.s32.totalorder %s16, 1
      %p118 = scmp.ne.s32.totalorder %s113, %s115
      %p119 = scmp.eq.s32.totalorder %s16, 0
      %p120 = por %p118, %p119
      %p121 = scmp.ne.s32.totalorder %s113, %s115
      %p122 = scmp.eq.s32.totalorder %s21, 1
      %p123 = por %p121, %p122
      %p124 = scmp.ne.s32.totalorder %s115, %s116
      %p125 = scmp.eq.s32.totalorder %s21, 0
      %p126 = por %p124, %p125
      %p127 = scmp.ne.s32.totalorder %s115, %s116
      %p128 = scmp.eq.s32.totalorder %s22, 1
      %p129 = por %p127, %p128
      %p131 = scmp.ne.s32.totalorder %s116, %s130
      %p132 = scmp.eq.s32.totalorder %s22, 0
      %p133 = por %p131, %p132
      %s135 = sadd.s32 %s134, 1
      %p138 = scmp.eq.s32.totalorder %s16, 1
      %p139 = scmp.ne.s32.totalorder %s134, %s136
      %p140 = scmp.eq.s32.totalorder %s16, 0
      %p141 = por %p139, %p140
      %p142 = scmp.ne.s32.totalorder %s134, %s136
      %p143 = scmp.eq.s32.totalorder %s21, 1
      %p144 = por %p142, %p143
      %p145 = scmp.ne.s32.totalorder %s136, %s137
      %p146 = scmp.eq.s32.totalorder %s21, 0
      %p147 = por %p145, %p146
      %p148 = scmp.ne.s32.totalorder %s136, %s137
      %p149 = scmp.eq.s32.totalorder %s22, 1
      %p150 = por %p148, %p149
      %p152 = scmp.ne.s32.totalorder %s137, %s151
      %p153 = scmp.eq.s32.totalorder %s22, 0
      %p154 = por %p152, %p153
      %s156 = sadd.s32 %s155, 1
      %p159 = scmp.eq.s32.totalorder %s16, 1
      %p160 = scmp.ne.s32.totalorder %s155, %s157
      %p161 = scmp.eq.s32.totalorder %s16, 0
      %p162 = por %p160, %p161
      %p163 = scmp.ne.s32.totalorder %s155, %s157
      %p164 = scmp.eq.s32.totalorder %s21, 1
      %p165 = por %p163, %p164
      %p166 = scmp.ne.s32.totalorder %s157, %s158
      %p167 = scmp.eq.s32.totalorder %s21, 0
      %p168 = por %p166, %p167
      %p169 = scmp.ne.s32.totalorder %s157, %s158
      %p170 = scmp.eq.s32.totalorder %s22, 1
      %p171 = por %p169, %p170
      %p173 = scmp.ne.s32.totalorder %s158, %s172
      %p174 = scmp.eq.s32.totalorder %s22, 0
      %p175 = por %p173, %p174
      %s176 = ssub.s32 %s16, %s23
      %p177 = scmp.eq.s32.totalorder %s176, 0
      %s179 = sadd.s32 %s178, 1
      %s180 = scalar_select %p177, %s178, %s179
      %p183 = pneg %p177
      %p184 = scmp.eq.s32.totalorder %s16, 1
      %p185 = por %p183, %p184
      %p186 = scmp.ne.s32.totalorder %s178, %s181
      %p187 = scmp.eq.s32.totalorder %s16, 0
      %p188 = por %p186, %p187
      %p189 = scmp.ne.s32.totalorder %s178, %s181
      %p190 = scmp.eq.s32.totalorder %s21, 1
      %p191 = por %p189, %p190
      %p192 = scmp.ne.s32.totalorder %s181, %s182
      %p193 = scmp.eq.s32.totalorder %s21, 0
      %p194 = por %p192, %p193
      %p195 = scmp.ne.s32.totalorder %s181, %s182
      %p196 = scmp.eq.s32.totalorder %s22, 1
      %p197 = por %p195, %p196
      %p199 = scmp.ne.s32.totalorder %s182, %s198
      %p200 = scmp.eq.s32.totalorder %s22, 0
      %p201 = por %p199, %p200
      %p202 = scmp.le.s32.totalorder 1, %s16
      %p203 = scmp.lt.s32.totalorder %s16, 3
      %p204 = pnand %p202, %p203
      %p205 = pneg %p204
      // Predicated region
      $region9: #{tpu_custom_call.1} parent=5 // pred_check
        _
      $region10: #{tpu_custom_call.1} parent=5 // pred_check_branch
        %207 = sbr.rel (%p204) target = $region12
      $region11: #{tpu_custom_call.1} parent=5 // pred_region
        %s208 = ssub.s32 %s16, 1
        // Predicated region
        $region13: #{tpu_custom_call.1} parent=11 // pred_check
          %p209 = pneg %p63
        $region14: #{tpu_custom_call.1} parent=11 // pred_check_branch
          %211 = sbr.rel (%p209) target = $region16
        $region15: #{tpu_custom_call.1} parent=11 // pred_region
          _
        $region16: #{tpu_custom_call.1} parent=11 // pred_fallthru
          _
        // Predicated region
        $region17: #{tpu_custom_call.1} parent=11 // pred_check
          %p212 = pneg %p84
        $region18: #{tpu_custom_call.1} parent=11 // pred_check_branch
          %214 = sbr.rel (%p212) target = $region20
        $region19: #{tpu_custom_call.1} parent=11 // pred_region
          _
        $region20: #{tpu_custom_call.1} parent=11 // pred_fallthru
          _
        // Predicated region
        $region21: #{tpu_custom_call.1} parent=11 // pred_check
          %p215 = pneg %p105
        $region22: #{tpu_custom_call.1} parent=11 // pred_check_branch
          %217 = sbr.rel (%p215) target = $region24
        $region23: #{tpu_custom_call.1} parent=11 // pred_region
          _
        $region24: #{tpu_custom_call.1} parent=11 // pred_fallthru
          _
        // Predicated region
        $region25: #{tpu_custom_call.1} parent=11 // pred_check
          %p218 = pneg %p126
        $region26: #{tpu_custom_call.1} parent=11 // pred_check_branch
          %220 = sbr.rel (%p218) target = $region28
        $region27: #{tpu_custom_call.1} parent=11 // pred_region
          _
        $region28: #{tpu_custom_call.1} parent=11 // pred_fallthru
          _
        // Predicated region
        $region29: #{tpu_custom_call.1} parent=11 // pred_check
          %p221 = pneg %p147
        $region30: #{tpu_custom_call.1} parent=11 // pred_check_branch
          %223 = sbr.rel (%p221) target = $region32
        $region31: #{tpu_custom_call.1} parent=11 // pred_region
          _
        $region32: #{tpu_custom_call.1} parent=11 // pred_fallthru
          _
        // Predicated region
        $region33: #{tpu_custom_call.1} parent=11 // pred_check
          %p224 = pneg %p168
        $region34: #{tpu_custom_call.1} parent=11 // pred_check_branch
          %226 = sbr.rel (%p224) target = $region36
        $region35: #{tpu_custom_call.1} parent=11 // pred_region
          _
        $region36: #{tpu_custom_call.1} parent=11 // pred_fallthru
          _
      $region12: #{tpu_custom_call.1} parent=5 // pred_fallthru
        _
      %p227 = scmp.lt.s32.totalorder %s16, 2
      // Predicated region
      $region37: #{tpu_custom_call.1} parent=5 // pred_check
        %p228 = pneg %p227
      $region38: #{tpu_custom_call.1} parent=5 // pred_check_branch
        %230 = sbr.rel (%p228) target = $region40
      $region39: #{tpu_custom_call.1} parent=5 // pred_region
        // Predicated region
        $region41: #{tpu_custom_call.1} parent=39 // pred_check
          %p231 = pneg %p36
        $region42: #{tpu_custom_call.1} parent=39 // pred_check_branch
          %233 = sbr.rel (%p231) target = $region44
        $region43: #{tpu_custom_call.1} parent=39 // pred_region
          %s234 = smul.u32 2, %s16
          %p235 = scmp.lt.s32.totalorder %s234, 3
          %s236 = scalar_select %p235, %s234, 3
          %s237 = smul.addr %s236, 4
          %s238 = scalar_lea.vmem %s0, %s237
          %s239 = smul.u32 2, %s16
        $region44: #{tpu_custom_call.1} parent=39 // pred_fallthru
          _
      $region40: #{tpu_custom_call.1} parent=5 // pred_fallthru
        _
      %p240 = scmp.le.s32.totalorder 1, %s16
      %p241 = scmp.lt.s32.totalorder %s16, 3
      %p242 = pnand %p240, %p241
      %p243 = pneg %p242
      // Predicated region
      $region45: #{tpu_custom_call.1} parent=5 // pred_check
        _
      $region46: #{tpu_custom_call.1} parent=5 // pred_check_branch
        %245 = sbr.rel (%p242) target = $region48
      $region47: #{tpu_custom_call.1} parent=5 // pred_region
        %s246 = ssub.s32 %s16, 1
        %s247 = smul.u32 2, %s21
        %p248 = scmp.lt.s32.totalorder %s247, 3
        %s249 = scalar_select %p248, %s247, 3
        %s250 = smul.addr %s249, 4
        %s251 = scalar_lea.vmem %s0, %s250
        %p252 = pneg %p42
        %p253 = pneg %p39
        %p254 = pneg %p63
        %p255 = pneg %p60
        %p256 = pneg %p84
        %p257 = pneg %p81
        %p258 = pneg %p105
        %p259 = pneg %p102
        %p260 = pneg %p126
        %p261 = pneg %p123
        %p262 = pneg %p147
        %p263 = pneg %p144
        %p264 = pneg %p168
        %p265 = pneg %p165
        %p266 = pneg %p194
        %p267 = pneg %p191
        %s268 = sand.u32 %s181, 1
        %s269 = scalar_lea.sflag [#allocation3], %s268
        %s270 = sand.u32 %s181, 1
        %s271 = smul.addr %s270, 8
        %s272 = scalar_lea.vmem [#allocation2], %s271
        %s273 = smul.u32 2, %s21
        %p274 = scmp.lt.s32.totalorder %s273, 3
        %s275 = scalar_select %p274, %s273, 3
        %s276 = smul.addr %s275, 4
        %s277 = scalar_lea.vmem %s0, %s276
        %s278 = smul.u32 2, %s21
        %s279 = smul.u32 2, %s21
        %v280 = vld [vmem:[%s277] sm:$0xff]
        %v281 = vld [vmem:[%s1] sm:$0xff]
        %v282 = vld [vmem:[%s1 + $0x8] sm:$0xff]
        %v283 = vld [vmem:[%s1 + $0x10] sm:$0xff]
        %v284 = vld [vmem:[%s1 + $0x18] sm:$0xff]
        %v285 = vld [vmem:[%s1 + $0x20] sm:$0xff]
        %v286 = vld [vmem:[%s1 + $0x28] sm:$0xff]
        %v287 = vld [vmem:[%s1 + $0x30] sm:$0xff]
        %v288 = vld [vmem:[%s1 + $0x38] sm:$0xff]
        %v289 = vld [vmem:[%s2] sm:$0xff]
        %v290 = vld [vmem:[%s2 + $0x8] sm:$0xff]
        %v291 = vld [vmem:[%s2 + $0x10] sm:$0xff]
        %v292 = vld [vmem:[%s2 + $0x18] sm:$0xff]
        %v293 = vld [vmem:[%s2 + $0x20] sm:$0xff]
        %v294 = vld [vmem:[%s2 + $0x28] sm:$0xff]
        %v295 = vld [vmem:[%s2 + $0x30] sm:$0xff]
        %v296 = vld [vmem:[%s2 + $0x38] sm:$0xff]
        %298 = vset.pattern.permute.xlu0 0
        %299 = vperm.xlu0 %298, %v281
        %v300 = vpop.permute.xlu0 %299
        %303 = vset.pattern.permute.xlu0 0
        %304 = vperm.xlu0 %303, %v282
        %v305 = vpop.permute.xlu0 %304
        %308 = vset.pattern.permute.xlu0 0
        %309 = vperm.xlu0 %308, %v283
        %v310 = vpop.permute.xlu0 %309
        %313 = vset.pattern.permute.xlu0 0
        %314 = vperm.xlu0 %313, %v284
        %v315 = vpop.permute.xlu0 %314
        %318 = vset.pattern.permute.xlu0 0
        %319 = vperm.xlu0 %318, %v285
        %v320 = vpop.permute.xlu0 %319
        %323 = vset.pattern.permute.xlu0 0
        %324 = vperm.xlu0 %323, %v286
        %v325 = vpop.permute.xlu0 %324
        %328 = vset.pattern.permute.xlu0 0
        %329 = vperm.xlu0 %328, %v287
        %v330 = vpop.permute.xlu0 %329
        %333 = vset.pattern.permute.xlu0 0
        %334 = vperm.xlu0 %333, %v288
        %v335 = vpop.permute.xlu0 %334
        %v338 = vperm.slane %v280, 0
        %v339 = vperm.slane %v280, 4
        %v342 = vperm.slane %v338, 0
        %v343 = vperm.slane %v339, 0
        %v344 = vmul.f32 %v300, %v342
        %v345 = vmul.f32 %v300, %v343
        %v346 = vmul.f32 %v305, %v342
        %v347 = vmul.f32 %v305, %v343
        %v348 = vmul.f32 %v310, %v342
        %v349 = vmul.f32 %v310, %v343
        %v350 = vmul.f32 %v315, %v342
        %v351 = vmul.f32 %v315, %v343
        %v352 = vmul.f32 %v320, %v342
        %v353 = vmul.f32 %v320, %v343
        %v354 = vmul.f32 %v325, %v342
        %v355 = vmul.f32 %v325, %v343
        %v356 = vmul.f32 %v330, %v342
        %v357 = vmul.f32 %v330, %v343
        %v358 = vmul.f32 %v335, %v342
        %v359 = vmul.f32 %v335, %v343
        %361 = vset.pattern.permute.xlu0 0
        %362 = vperm.xlu0 %361, %v289
        %v363 = vpop.permute.xlu0 %362
        %366 = vset.pattern.permute.xlu0 0
        %367 = vperm.xlu0 %366, %v290
        %v368 = vpop.permute.xlu0 %367
        %371 = vset.pattern.permute.xlu0 0
        %372 = vperm.xlu0 %371, %v291
        %v373 = vpop.permute.xlu0 %372
        %376 = vset.pattern.permute.xlu0 0
        %377 = vperm.xlu0 %376, %v292
        %v378 = vpop.permute.xlu0 %377
        %381 = vset.pattern.permute.xlu0 0
        %382 = vperm.xlu0 %381, %v293
        %v383 = vpop.permute.xlu0 %382
        %386 = vset.pattern.permute.xlu0 0
        %387 = vperm.xlu0 %386, %v294
        %v388 = vpop.permute.xlu0 %387
        %391 = vset.pattern.permute.xlu0 0
        %392 = vperm.xlu0 %391, %v295
        %v393 = vpop.permute.xlu0 %392
        %396 = vset.pattern.permute.xlu0 0
        %397 = vperm.xlu0 %396, %v296
        %v398 = vpop.permute.xlu0 %397
        %v400 = vadd.f32 %v363, %v344
        %v401 = vadd.f32 %v363, %v345
        %v402 = vadd.f32 %v368, %v346
        %v403 = vadd.f32 %v368, %v347
        %v404 = vadd.f32 %v373, %v348
        %v405 = vadd.f32 %v373, %v349
        %v406 = vadd.f32 %v378, %v350
        %v407 = vadd.f32 %v378, %v351
        %v408 = vadd.f32 %v383, %v352
        %v409 = vadd.f32 %v383, %v353
        %v410 = vadd.f32 %v388, %v354
        %v411 = vadd.f32 %v388, %v355
        %v412 = vadd.f32 %v393, %v356
        %v413 = vadd.f32 %v393, %v357
        %v414 = vadd.f32 %v398, %v358
        %v415 = vadd.f32 %v398, %v359
        %416 = vset.pattern.permute.xlu0 1
        %417 = vperm.xlu0 %416, %v281
        %v418 = vpop.permute.xlu0 %417
        %420 = vset.pattern.permute.xlu0 1
        %421 = vperm.xlu0 %420, %v282
        %v422 = vpop.permute.xlu0 %421
        %424 = vset.pattern.permute.xlu0 1
        %425 = vperm.xlu0 %424, %v283
        %v426 = vpop.permute.xlu0 %425
        %428 = vset.pattern.permute.xlu0 1
        %429 = vperm.xlu0 %428, %v284
        %v430 = vpop.permute.xlu0 %429
        %432 = vset.pattern.permute.xlu0 1
        %433 = vperm.xlu0 %432, %v285
        %v434 = vpop.permute.xlu0 %433
        %436 = vset.pattern.permute.xlu0 1
        %437 = vperm.xlu0 %436, %v286
        %v438 = vpop.permute.xlu0 %437
        %440 = vset.pattern.permute.xlu0 1
        %441 = vperm.xlu0 %440, %v287
        %v442 = vpop.permute.xlu0 %441
        %444 = vset.pattern.permute.xlu0 1
        %445 = vperm.xlu0 %444, %v288
        %v446 = vpop.permute.xlu0 %445
        %v448 = vperm.slane %v280, 1
        %v449 = vperm.slane %v280, 5
        %v452 = vperm.slane %v448, 1
        %v453 = vperm.slane %v449, 1
        %v454 = vmul.f32 %v418, %v452
        %v455 = vmul.f32 %v418, %v453
        %v456 = vmul.f32 %v422, %v452
        %v457 = vmul.f32 %v422, %v453
        %v458 = vmul.f32 %v426, %v452
        %v459 = vmul.f32 %v426, %v453
        %v460 = vmul.f32 %v430, %v452
        %v461 = vmul.f32 %v430, %v453
        %v462 = vmul.f32 %v434, %v452
        %v463 = vmul.f32 %v434, %v453
        %v464 = vmul.f32 %v438, %v452
        %v465 = vmul.f32 %v438, %v453
        %v466 = vmul.f32 %v442, %v452
        %v467 = vmul.f32 %v442, %v453
        %v468 = vmul.f32 %v446, %v452
        %v469 = vmul.f32 %v446, %v453
        %v470 = vadd.f32 %v400, %v454
        %v471 = vadd.f32 %v401, %v455
        %v472 = vadd.f32 %v402, %v456
        %v473 = vadd.f32 %v403, %v457
        %v474 = vadd.f32 %v404, %v458
        %v475 = vadd.f32 %v405, %v459
        %v476 = vadd.f32 %v406, %v460
        %v477 = vadd.f32 %v407, %v461
        %v478 = vadd.f32 %v408, %v462
        %v479 = vadd.f32 %v409, %v463
        %v480 = vadd.f32 %v410, %v464
        %v481 = vadd.f32 %v411, %v465
        %v482 = vadd.f32 %v412, %v466
        %v483 = vadd.f32 %v413, %v467
        %v484 = vadd.f32 %v414, %v468
        %v485 = vadd.f32 %v415, %v469
        %486 = vset.pattern.permute.xlu0 2
        %487 = vperm.xlu0 %486, %v281
        %v488 = vpop.permute.xlu0 %487
        %490 = vset.pattern.permute.xlu0 2
        %491 = vperm.xlu0 %490, %v282
        %v492 = vpop.permute.xlu0 %491
        %494 = vset.pattern.permute.xlu0 2
        %495 = vperm.xlu0 %494, %v283
        %v496 = vpop.permute.xlu0 %495
        %498 = vset.pattern.permute.xlu0 2
        %499 = vperm.xlu0 %498, %v284
        %v500 = vpop.permute.xlu0 %499
        %502 = vset.pattern.permute.xlu0 2
        %503 = vperm.xlu0 %502, %v285
        %v504 = vpop.permute.xlu0 %503
        %506 = vset.pattern.permute.xlu0 2
        %507 = vperm.xlu0 %506, %v286
        %v508 = vpop.permute.xlu0 %507
        %510 = vset.pattern.permute.xlu0 2
        %511 = vperm.xlu0 %510, %v287
        %v512 = vpop.permute.xlu0 %511
        %514 = vset.pattern.permute.xlu0 2
        %515 = vperm.xlu0 %514, %v288
        %v516 = vpop.permute.xlu0 %515
        %v518 = vperm.slane %v280, 2
        %v519 = vperm.slane %v280, 6
        %v522 = vperm.slane %v518, 2
        %v523 = vperm.slane %v519, 2
        %v524 = vmul.f32 %v488, %v522
        %v525 = vmul.f32 %v488, %v523
        %v526 = vmul.f32 %v492, %v522
        %v527 = vmul.f32 %v492, %v523
        %v528 = vmul.f32 %v496, %v522
        %v529 = vmul.f32 %v496, %v523
        %v530 = vmul.f32 %v500, %v522
        %v531 = vmul.f32 %v500, %v523
        %v532 = vmul.f32 %v504, %v522
        %v533 = vmul.f32 %v504, %v523
        %v534 = vmul.f32 %v508, %v522
        %v535 = vmul.f32 %v508, %v523
        %v536 = vmul.f32 %v512, %v522
        %v537 = vmul.f32 %v512, %v523
        %v538 = vmul.f32 %v516, %v522
        %v539 = vmul.f32 %v516, %v523
        %v540 = vadd.f32 %v470, %v524
        %v541 = vadd.f32 %v471, %v525
        %v542 = vadd.f32 %v472, %v526
        %v543 = vadd.f32 %v473, %v527
        %v544 = vadd.f32 %v474, %v528
        %v545 = vadd.f32 %v475, %v529
        %v546 = vadd.f32 %v476, %v530
        %v547 = vadd.f32 %v477, %v531
        %v548 = vadd.f32 %v478, %v532
        %v549 = vadd.f32 %v479, %v533
        %v550 = vadd.f32 %v480, %v534
        %v551 = vadd.f32 %v481, %v535
        %v552 = vadd.f32 %v482, %v536
        %v553 = vadd.f32 %v483, %v537
        %v554 = vadd.f32 %v484, %v538
        %v555 = vadd.f32 %v485, %v539
        %556 = vset.pattern.permute.xlu0 3
        %557 = vperm.xlu0 %556, %v281
        %v558 = vpop.permute.xlu0 %557
        %560 = vset.pattern.permute.xlu0 3
        %561 = vperm.xlu0 %560, %v282
        %v562 = vpop.permute.xlu0 %561
        %564 = vset.pattern.permute.xlu0 3
        %565 = vperm.xlu0 %564, %v283
        %v566 = vpop.permute.xlu0 %565
        %568 = vset.pattern.permute.xlu0 3
        %569 = vperm.xlu0 %568, %v284
        %v570 = vpop.permute.xlu0 %569
        %572 = vset.pattern.permute.xlu0 3
        %573 = vperm.xlu0 %572, %v285
        %v574 = vpop.permute.xlu0 %573
        %576 = vset.pattern.permute.xlu0 3
        %577 = vperm.xlu0 %576, %v286
        %v578 = vpop.permute.xlu0 %577
        %580 = vset.pattern.permute.xlu0 3
        %581 = vperm.xlu0 %580, %v287
        %v582 = vpop.permute.xlu0 %581
        %584 = vset.pattern.permute.xlu0 3
        %585 = vperm.xlu0 %584, %v288
        %v586 = vpop.permute.xlu0 %585
        %v588 = vperm.slane %v280, 3
        %v589 = vperm.slane %v280, 7
        %v592 = vperm.slane %v588, 3
        %v593 = vperm.slane %v589, 3
        %v594 = vmul.f32 %v558, %v592
        %v595 = vmul.f32 %v558, %v593
        %v596 = vmul.f32 %v562, %v592
        %v597 = vmul.f32 %v562, %v593
        %v598 = vmul.f32 %v566, %v592
        %v599 = vmul.f32 %v566, %v593
        %v600 = vmul.f32 %v570, %v592
        %v601 = vmul.f32 %v570, %v593
        %v602 = vmul.f32 %v574, %v592
        %v603 = vmul.f32 %v574, %v593
        %v604 = vmul.f32 %v578, %v592
        %v605 = vmul.f32 %v578, %v593
        %v606 = vmul.f32 %v582, %v592
        %v607 = vmul.f32 %v582, %v593
        %v608 = vmul.f32 %v586, %v592
        %v609 = vmul.f32 %v586, %v593
        %v610 = vadd.f32 %v540, %v594
        %v611 = vadd.f32 %v541, %v595
        %v612 = vadd.f32 %v542, %v596
        %v613 = vadd.f32 %v543, %v597
        %v614 = vadd.f32 %v544, %v598
        %v615 = vadd.f32 %v545, %v599
        %v616 = vadd.f32 %v546, %v600
        %v617 = vadd.f32 %v547, %v601
        %v618 = vadd.f32 %v548, %v602
        %v619 = vadd.f32 %v549, %v603
        %v620 = vadd.f32 %v550, %v604
        %v621 = vadd.f32 %v551, %v605
        %v622 = vadd.f32 %v552, %v606
        %v623 = vadd.f32 %v553, %v607
        %v624 = vadd.f32 %v554, %v608
        %v625 = vadd.f32 %v555, %v609
        %v626 = vld [vmem:[%s3] sm:$0xff]
        %v627 = vld [vmem:[%s3 + $0x8] sm:$0xff]
        %v628 = vld [vmem:[%s3 + $0x10] sm:$0xff]
        %v629 = vld [vmem:[%s3 + $0x18] sm:$0xff]
        %v630 = vld [vmem:[%s4] sm:$0xff]
        %v631 = vld [vmem:[%s4 + $0x8] sm:$0xff]
        %v632 = vld [vmem:[%s4 + $0x10] sm:$0xff]
        %v633 = vld [vmem:[%s4 + $0x18] sm:$0xff]
        %v634 = vsub.f32 0.0, %v610
        %v635 = vsub.f32 0.0, %v611
        %v636 = vsub.f32 0.0, %v612
        %v637 = vsub.f32 0.0, %v613
        %v638 = vsub.f32 0.0, %v614
        %v639 = vsub.f32 0.0, %v615
        %v640 = vsub.f32 0.0, %v616
        %v641 = vsub.f32 0.0, %v617
        %v642 = vsub.f32 0.0, %v618
        %v643 = vsub.f32 0.0, %v619
        %v644 = vsub.f32 0.0, %v620
        %v645 = vsub.f32 0.0, %v621
        %v646 = vsub.f32 0.0, %v622
        %v647 = vsub.f32 0.0, %v623
        %v648 = vsub.f32 0.0, %v624
        %v649 = vsub.f32 0.0, %v625
        %v650 = vmul.f32 %v634, 1.442695
        %v651 = vpow.pop %v650
        %v652 = vmul.f32 %v635, 1.442695
        %v653 = vpow.pop %v652
        %v654 = vmul.f32 %v636, 1.442695
        %v655 = vpow.pop %v654
        %v656 = vmul.f32 %v637, 1.442695
        %v657 = vpow.pop %v656
        %v658 = vmul.f32 %v638, 1.442695
        %v659 = vpow.pop %v658
        %v660 = vmul.f32 %v639, 1.442695
        %v661 = vpow.pop %v660
        %v662 = vmul.f32 %v640, 1.442695
        %v663 = vpow.pop %v662
        %v664 = vmul.f32 %v641, 1.442695
        %v665 = vpow.pop %v664
        %v666 = vmul.f32 %v642, 1.442695
        %v667 = vpow.pop %v666
        %v668 = vmul.f32 %v643, 1.442695
        %v669 = vpow.pop %v668
        %v670 = vmul.f32 %v644, 1.442695
        %v671 = vpow.pop %v670
        %v672 = vmul.f32 %v645, 1.442695
        %v673 = vpow.pop %v672
        %v674 = vmul.f32 %v646, 1.442695
        %v675 = vpow.pop %v674
        %v676 = vmul.f32 %v647, 1.442695
        %v677 = vpow.pop %v676
        %v678 = vmul.f32 %v648, 1.442695
        %v679 = vpow.pop %v678
        %v680 = vmul.f32 %v649, 1.442695
        %v681 = vpow.pop %v680
        %v682 = vadd.f32 %v651, 1.0
        %v683 = vadd.f32 %v653, 1.0
        %v684 = vadd.f32 %v655, 1.0
        %v685 = vadd.f32 %v657, 1.0
        %v686 = vadd.f32 %v659, 1.0
        %v687 = vadd.f32 %v661, 1.0
        %v688 = vadd.f32 %v663, 1.0
        %v689 = vadd.f32 %v665, 1.0
        %v690 = vadd.f32 %v667, 1.0
        %v691 = vadd.f32 %v669, 1.0
        %v692 = vadd.f32 %v671, 1.0
        %v693 = vadd.f32 %v673, 1.0
        %v694 = vadd.f32 %v675, 1.0
        %v695 = vadd.f32 %v677, 1.0
        %v696 = vadd.f32 %v679, 1.0
        %v697 = vadd.f32 %v681, 1.0
        %v698 = vrcp.pop %v682
        %v699 = vmul.f32 %v682, %v698
        %v700 = vsub.f32 1.0, %v699
        %v701 = vmul.f32 %v698, %v700
        %v702 = vadd.f32 %v698, %v701
        %vm703 = vweird.f32 %v682
        %vm704 = vweird.f32 %v698
        %vm705 = vmor %vm703, %vm704
        %v706 = vsel %vm705, %v698, %v702
        %v707 = vand.u32 2147483647, %v682
        %vm708 = vcmp.eq.f32.partialorder %v707, 8.507059e+37
        %v709 = vand.u32 %v682, 2147483648
        %v710 = vor.u32 1.1754944e-38, %v709
        %v711 = vsel %vm708, %v710, %v706
        %v712 = vmul.f32 1.0, %v711
        %v713 = vrcp.pop %v683
        %v714 = vmul.f32 %v683, %v713
        %v715 = vsub.f32 1.0, %v714
        %v716 = vmul.f32 %v713, %v715
        %v717 = vadd.f32 %v713, %v716
        %vm718 = vweird.f32 %v683
        %vm719 = vweird.f32 %v713
        %vm720 = vmor %vm718, %vm719
        %v721 = vsel %vm720, %v713, %v717
        %v722 = vand.u32 2147483647, %v683
        %vm723 = vcmp.eq.f32.partialorder %v722, 8.507059e+37
        %v724 = vand.u32 %v683, 2147483648
        %v725 = vor.u32 1.1754944e-38, %v724
        %v726 = vsel %vm723, %v725, %v721
        %v727 = vmul.f32 1.0, %v726
        %v728 = vrcp.pop %v684
        %v729 = vmul.f32 %v684, %v728
        %v730 = vsub.f32 1.0, %v729
        %v731 = vmul.f32 %v728, %v730
        %v732 = vadd.f32 %v728, %v731
        %vm733 = vweird.f32 %v684
        %vm734 = vweird.f32 %v728
        %vm735 = vmor %vm733, %vm734
        %v736 = vsel %vm735, %v728, %v732
        %v737 = vand.u32 2147483647, %v684
        %vm738 = vcmp.eq.f32.partialorder %v737, 8.507059e+37
        %v739 = vand.u32 %v684, 2147483648
        %v740 = vor.u32 1.1754944e-38, %v739
        %v741 = vsel %vm738, %v740, %v736
        %v742 = vmul.f32 1.0, %v741
        %v743 = vrcp.pop %v685
        %v744 = vmul.f32 %v685, %v743
        %v745 = vsub.f32 1.0, %v744
        %v746 = vmul.f32 %v743, %v745
        %v747 = vadd.f32 %v743, %v746
        %vm748 = vweird.f32 %v685
        %vm749 = vweird.f32 %v743
        %vm750 = vmor %vm748, %vm749
        %v751 = vsel %vm750, %v743, %v747
        %v752 = vand.u32 2147483647, %v685
        %vm753 = vcmp.eq.f32.partialorder %v752, 8.507059e+37
        %v754 = vand.u32 %v685, 2147483648
        %v755 = vor.u32 1.1754944e-38, %v754
        %v756 = vsel %vm753, %v755, %v751
        %v757 = vmul.f32 1.0, %v756
        %v758 = vrcp.pop %v686
        %v759 = vmul.f32 %v686, %v758
        %v760 = vsub.f32 1.0, %v759
        %v761 = vmul.f32 %v758, %v760
        %v762 = vadd.f32 %v758, %v761
        %vm763 = vweird.f32 %v686
        %vm764 = vweird.f32 %v758
        %vm765 = vmor %vm763, %vm764
        %v766 = vsel %vm765, %v758, %v762
        %v767 = vand.u32 2147483647, %v686
        %vm768 = vcmp.eq.f32.partialorder %v767, 8.507059e+37
        %v769 = vand.u32 %v686, 2147483648
        %v770 = vor.u32 1.1754944e-38, %v769
        %v771 = vsel %vm768, %v770, %v766
        %v772 = vmul.f32 1.0, %v771
        %v773 = vrcp.pop %v687
        %v774 = vmul.f32 %v687, %v773
        %v775 = vsub.f32 1.0, %v774
        %v776 = vmul.f32 %v773, %v775
        %v777 = vadd.f32 %v773, %v776
        %vm778 = vweird.f32 %v687
        %vm779 = vweird.f32 %v773
        %vm780 = vmor %vm778, %vm779
        %v781 = vsel %vm780, %v773, %v777
        %v782 = vand.u32 2147483647, %v687
        %vm783 = vcmp.eq.f32.partialorder %v782, 8.507059e+37
        %v784 = vand.u32 %v687, 2147483648
        %v785 = vor.u32 1.1754944e-38, %v784
        %v786 = vsel %vm783, %v785, %v781
        %v787 = vmul.f32 1.0, %v786
        %v788 = vrcp.pop %v688
        %v789 = vmul.f32 %v688, %v788
        %v790 = vsub.f32 1.0, %v789
        %v791 = vmul.f32 %v788, %v790
        %v792 = vadd.f32 %v788, %v791
        %vm793 = vweird.f32 %v688
        %vm794 = vweird.f32 %v788
        %vm795 = vmor %vm793, %vm794
        %v796 = vsel %vm795, %v788, %v792
        %v797 = vand.u32 2147483647, %v688
        %vm798 = vcmp.eq.f32.partialorder %v797, 8.507059e+37
        %v799 = vand.u32 %v688, 2147483648
        %v800 = vor.u32 1.1754944e-38, %v799
        %v801 = vsel %vm798, %v800, %v796
        %v802 = vmul.f32 1.0, %v801
        %v803 = vrcp.pop %v689
        %v804 = vmul.f32 %v689, %v803
        %v805 = vsub.f32 1.0, %v804
        %v806 = vmul.f32 %v803, %v805
        %v807 = vadd.f32 %v803, %v806
        %vm808 = vweird.f32 %v689
        %vm809 = vweird.f32 %v803
        %vm810 = vmor %vm808, %vm809
        %v811 = vsel %vm810, %v803, %v807
        %v812 = vand.u32 2147483647, %v689
        %vm813 = vcmp.eq.f32.partialorder %v812, 8.507059e+37
        %v814 = vand.u32 %v689, 2147483648
        %v815 = vor.u32 1.1754944e-38, %v814
        %v816 = vsel %vm813, %v815, %v811
        %v817 = vmul.f32 1.0, %v816
        %v818 = vrcp.pop %v690
        %v819 = vmul.f32 %v690, %v818
        %v820 = vsub.f32 1.0, %v819
        %v821 = vmul.f32 %v818, %v820
        %v822 = vadd.f32 %v818, %v821
        %vm823 = vweird.f32 %v690
        %vm824 = vweird.f32 %v818
        %vm825 = vmor %vm823, %vm824
        %v826 = vsel %vm825, %v818, %v822
        %v827 = vand.u32 2147483647, %v690
        %vm828 = vcmp.eq.f32.partialorder %v827, 8.507059e+37
        %v829 = vand.u32 %v690, 2147483648
        %v830 = vor.u32 1.1754944e-38, %v829
        %v831 = vsel %vm828, %v830, %v826
        %v832 = vmul.f32 1.0, %v831
        %v833 = vrcp.pop %v691
        %v834 = vmul.f32 %v691, %v833
        %v835 = vsub.f32 1.0, %v834
        %v836 = vmul.f32 %v833, %v835
        %v837 = vadd.f32 %v833, %v836
        %vm838 = vweird.f32 %v691
        %vm839 = vweird.f32 %v833
        %vm840 = vmor %vm838, %vm839
        %v841 = vsel %vm840, %v833, %v837
        %v842 = vand.u32 2147483647, %v691
        %vm843 = vcmp.eq.f32.partialorder %v842, 8.507059e+37
        %v844 = vand.u32 %v691, 2147483648
        %v845 = vor.u32 1.1754944e-38, %v844
        %v846 = vsel %vm843, %v845, %v841
        %v847 = vmul.f32 1.0, %v846
        %v848 = vrcp.pop %v692
        %v849 = vmul.f32 %v692, %v848
        %v850 = vsub.f32 1.0, %v849
        %v851 = vmul.f32 %v848, %v850
        %v852 = vadd.f32 %v848, %v851
        %vm853 = vweird.f32 %v692
        %vm854 = vweird.f32 %v848
        %vm855 = vmor %vm853, %vm854
        %v856 = vsel %vm855, %v848, %v852
        %v857 = vand.u32 2147483647, %v692
        %vm858 = vcmp.eq.f32.partialorder %v857, 8.507059e+37
        %v859 = vand.u32 %v692, 2147483648
        %v860 = vor.u32 1.1754944e-38, %v859
        %v861 = vsel %vm858, %v860, %v856
        %v862 = vmul.f32 1.0, %v861
        %v863 = vrcp.pop %v693
        %v864 = vmul.f32 %v693, %v863
        %v865 = vsub.f32 1.0, %v864
        %v866 = vmul.f32 %v863, %v865
        %v867 = vadd.f32 %v863, %v866
        %vm868 = vweird.f32 %v693
        %vm869 = vweird.f32 %v863
        %vm870 = vmor %vm868, %vm869
        %v871 = vsel %vm870, %v863, %v867
        %v872 = vand.u32 2147483647, %v693
        %vm873 = vcmp.eq.f32.partialorder %v872, 8.507059e+37
        %v874 = vand.u32 %v693, 2147483648
        %v875 = vor.u32 1.1754944e-38, %v874
        %v876 = vsel %vm873, %v875, %v871
        %v877 = vmul.f32 1.0, %v876
        %v878 = vrcp.pop %v694
        %v879 = vmul.f32 %v694, %v878
        %v880 = vsub.f32 1.0, %v879
        %v881 = vmul.f32 %v878, %v880
        %v882 = vadd.f32 %v878, %v881
        %vm883 = vweird.f32 %v694
        %vm884 = vweird.f32 %v878
        %vm885 = vmor %vm883, %vm884
        %v886 = vsel %vm885, %v878, %v882
        %v887 = vand.u32 2147483647, %v694
        %vm888 = vcmp.eq.f32.partialorder %v887, 8.507059e+37
        %v889 = vand.u32 %v694, 2147483648
        %v890 = vor.u32 1.1754944e-38, %v889
        %v891 = vsel %vm888, %v890, %v886
        %v892 = vmul.f32 1.0, %v891
        %v893 = vrcp.pop %v695
        %v894 = vmul.f32 %v695, %v893
        %v895 = vsub.f32 1.0, %v894
        %v896 = vmul.f32 %v893, %v895
        %v897 = vadd.f32 %v893, %v896
        %vm898 = vweird.f32 %v695
        %vm899 = vweird.f32 %v893
        %vm900 = vmor %vm898, %vm899
        %v901 = vsel %vm900, %v893, %v897
        %v902 = vand.u32 2147483647, %v695
        %vm903 = vcmp.eq.f32.partialorder %v902, 8.507059e+37
        %v904 = vand.u32 %v695, 2147483648
        %v905 = vor.u32 1.1754944e-38, %v904
        %v906 = vsel %vm903, %v905, %v901
        %v907 = vmul.f32 1.0, %v906
        %v908 = vrcp.pop %v696
        %v909 = vmul.f32 %v696, %v908
        %v910 = vsub.f32 1.0, %v909
        %v911 = vmul.f32 %v908, %v910
        %v912 = vadd.f32 %v908, %v911
        %vm913 = vweird.f32 %v696
        %vm914 = vweird.f32 %v908
        %vm915 = vmor %vm913, %vm914
        %v916 = vsel %vm915, %v908, %v912
        %v917 = vand.u32 2147483647, %v696
        %vm918 = vcmp.eq.f32.partialorder %v917, 8.507059e+37
        %v919 = vand.u32 %v696, 2147483648
        %v920 = vor.u32 1.1754944e-38, %v919
        %v921 = vsel %vm918, %v920, %v916
        %v922 = vmul.f32 1.0, %v921
        %v923 = vrcp.pop %v697
        %v924 = vmul.f32 %v697, %v923
        %v925 = vsub.f32 1.0, %v924
        %v926 = vmul.f32 %v923, %v925
        %v927 = vadd.f32 %v923, %v926
        %vm928 = vweird.f32 %v697
        %vm929 = vweird.f32 %v923
        %vm930 = vmor %vm928, %vm929
        %v931 = vsel %vm930, %v923, %v927
        %v932 = vand.u32 2147483647, %v697
        %vm933 = vcmp.eq.f32.partialorder %v932, 8.507059e+37
        %v934 = vand.u32 %v697, 2147483648
        %v935 = vor.u32 1.1754944e-38, %v934
        %v936 = vsel %vm933, %v935, %v931
        %v937 = vmul.f32 1.0, %v936
        %939 = vset.pattern.permute.xlu0 0
        %940 = vperm.xlu0 %939, %v630
        %v941 = vpop.permute.xlu0 %940
        %944 = vset.pattern.permute.xlu0 0
        %945 = vperm.xlu0 %944, %v631
        %v946 = vpop.permute.xlu0 %945
        %949 = vset.pattern.permute.xlu0 0
        %950 = vperm.xlu0 %949, %v632
        %v951 = vpop.permute.xlu0 %950
        %954 = vset.pattern.permute.xlu0 0
        %955 = vperm.xlu0 %954, %v633
        %v956 = vpop.permute.xlu0 %955
        %vm958 = vcmask 523264
        %v960 = vsel %vm958, %v626, 0
        %v963 = vsel %vm958, %v627, 0
        %v966 = vsel %vm958, %v628, 0
        %v969 = vsel %vm958, %v629, 0
        %971 = vmatpush.msra.mxu0 0.0
        %972 = vmatpush.msra.mxu0 0.0
        %973 = vmatpush.msra.mxu0 0.0
        %974 = vmatpush.msra.mxu0 0.0
        %975 = vmatpush.msra.mxu0 0.0
        %976 = vmatpush.msra.mxu0 0.0
        %977 = vmatpush.msra.mxu0 0.0
        %978 = vmatpush.msra.mxu0 0.0
        %979 = vmatpush.msra.mxu0 %v922
        %980 = vmatpush.msra.mxu0 %v892
        %981 = vmatpush.msra.mxu0 %v862
        %982 = vmatpush.msra.mxu0 %v832
        %983 = vmatpush.msra.mxu0 %v802
        %984 = vmatpush.msra.mxu0 %v772
        %985 = vmatpush.msra.mxu0 %v742
        %986 = vmatpush.msra.mxu0 %v712
        %987 = vmatmul.f32.gmra.mxu0 %v960
        %v988 = vpop.f32.mrf.mxu0
        %v989 = vadd.f32 %v941, %v988
        %990 = vmatmul.f32.gmra.mxu0 %v963
        %v991 = vpop.f32.mrf.mxu0
        %v992 = vadd.f32 %v946, %v991
        %993 = vmatmul.f32.gmra.mxu0 %v966
        %v994 = vpop.f32.mrf.mxu0
        %v995 = vadd.f32 %v951, %v994
        %996 = vmatmul.f32.gmra.mxu0 %v969
        %v997 = vpop.f32.mrf.mxu0
        %v998 = vadd.f32 %v956, %v997
        %999 = vdwg.mxu0
        %1000 = vmatpush.msra.mxu0 0.0
        %1001 = vmatpush.msra.mxu0 0.0
        %1002 = vmatpush.msra.mxu0 0.0
        %1003 = vmatpush.msra.mxu0 0.0
        %1004 = vmatpush.msra.mxu0 0.0
        %1005 = vmatpush.msra.mxu0 0.0
        %1006 = vmatpush.msra.mxu0 0.0
        %1007 = vmatpush.msra.mxu0 0.0
        %1008 = vmatpush.msra.mxu0 %v937
        %1009 = vmatpush.msra.mxu0 %v907
        %1010 = vmatpush.msra.mxu0 %v877
        %1011 = vmatpush.msra.mxu0 %v847
        %1012 = vmatpush.msra.mxu0 %v817
        %1013 = vmatpush.msra.mxu0 %v787
        %1014 = vmatpush.msra.mxu0 %v757
        %1015 = vmatpush.msra.mxu0 %v727
        %1016 = vmatmul.f32.gmra.mxu0 %v960
        %v1017 = vpop.f32.mrf.mxu0
        %v1018 = vadd.f32 %v941, %v1017
        %1019 = vmatmul.f32.gmra.mxu0 %v963
        %v1020 = vpop.f32.mrf.mxu0
        %v1021 = vadd.f32 %v946, %v1020
        %1022 = vmatmul.f32.gmra.mxu0 %v966
        %v1023 = vpop.f32.mrf.mxu0
        %v1024 = vadd.f32 %v951, %v1023
        %1025 = vmatmul.f32.gmra.mxu0 %v969
        %v1026 = vpop.f32.mrf.mxu0
        %v1027 = vadd.f32 %v956, %v1026
        %1028 = vdwg.mxu0
        %v1029 = vld [vmem:[%s5] sm:$0xf]
        %v1030 = vld [vmem:[%s6] sm:$0xf]
        %v1031 = vsub.f32 0.0, %v989
        %v1032 = vsub.f32 0.0, %v1018
        %v1033 = vsub.f32 0.0, %v992
        %v1034 = vsub.f32 0.0, %v1021
        %v1035 = vsub.f32 0.0, %v995
        %v1036 = vsub.f32 0.0, %v1024
        %v1037 = vsub.f32 0.0, %v998
        %v1038 = vsub.f32 0.0, %v1027
        %v1039 = vmul.f32 %v1031, 1.442695
        %v1040 = vpow.pop %v1039
        %v1041 = vmul.f32 %v1032, 1.442695
        %v1042 = vpow.pop %v1041
        %v1043 = vmul.f32 %v1033, 1.442695
        %v1044 = vpow.pop %v1043
        %v1045 = vmul.f32 %v1034, 1.442695
        %v1046 = vpow.pop %v1045
        %v1047 = vmul.f32 %v1035, 1.442695
        %v1048 = vpow.pop %v1047
        %v1049 = vmul.f32 %v1036, 1.442695
        %v1050 = vpow.pop %v1049
        %v1051 = vmul.f32 %v1037, 1.442695
        %v1052 = vpow.pop %v1051
        %v1053 = vmul.f32 %v1038, 1.442695
        %v1054 = vpow.pop %v1053
        %v1055 = vadd.f32 %v1040, 1.0
        %v1056 = vadd.f32 %v1042, 1.0
        %v1057 = vadd.f32 %v1044, 1.0
        %v1058 = vadd.f32 %v1046, 1.0
        %v1059 = vadd.f32 %v1048, 1.0
        %v1060 = vadd.f32 %v1050, 1.0
        %v1061 = vadd.f32 %v1052, 1.0
        %v1062 = vadd.f32 %v1054, 1.0
        %v1063 = vrcp.pop %v1055
        %v1064 = vmul.f32 %v1055, %v1063
        %v1065 = vsub.f32 1.0, %v1064
        %v1066 = vmul.f32 %v1063, %v1065
        %v1067 = vadd.f32 %v1063, %v1066
        %vm1068 = vweird.f32 %v1055
        %vm1069 = vweird.f32 %v1063
        %vm1070 = vmor %vm1068, %vm1069
        %v1071 = vsel %vm1070, %v1063, %v1067
        %v1072 = vand.u32 2147483647, %v1055
        %vm1073 = vcmp.eq.f32.partialorder %v1072, 8.507059e+37
        %v1074 = vand.u32 %v1055, 2147483648
        %v1075 = vor.u32 1.1754944e-38, %v1074
        %v1076 = vsel %vm1073, %v1075, %v1071
        %v1077 = vmul.f32 1.0, %v1076
        %v1078 = vrcp.pop %v1056
        %v1079 = vmul.f32 %v1056, %v1078
        %v1080 = vsub.f32 1.0, %v1079
        %v1081 = vmul.f32 %v1078, %v1080
        %v1082 = vadd.f32 %v1078, %v1081
        %vm1083 = vweird.f32 %v1056
        %vm1084 = vweird.f32 %v1078
        %vm1085 = vmor %vm1083, %vm1084
        %v1086 = vsel %vm1085, %v1078, %v1082
        %v1087 = vand.u32 2147483647, %v1056
        %vm1088 = vcmp.eq.f32.partialorder %v1087, 8.507059e+37
        %v1089 = vand.u32 %v1056, 2147483648
        %v1090 = vor.u32 1.1754944e-38, %v1089
        %v1091 = vsel %vm1088, %v1090, %v1086
        %v1092 = vmul.f32 1.0, %v1091
        %v1093 = vrcp.pop %v1057
        %v1094 = vmul.f32 %v1057, %v1093
        %v1095 = vsub.f32 1.0, %v1094
        %v1096 = vmul.f32 %v1093, %v1095
        %v1097 = vadd.f32 %v1093, %v1096
        %vm1098 = vweird.f32 %v1057
        %vm1099 = vweird.f32 %v1093
        %vm1100 = vmor %vm1098, %vm1099
        %v1101 = vsel %vm1100, %v1093, %v1097
        %v1102 = vand.u32 2147483647, %v1057
        %vm1103 = vcmp.eq.f32.partialorder %v1102, 8.507059e+37
        %v1104 = vand.u32 %v1057, 2147483648
        %v1105 = vor.u32 1.1754944e-38, %v1104
        %v1106 = vsel %vm1103, %v1105, %v1101
        %v1107 = vmul.f32 1.0, %v1106
        %v1108 = vrcp.pop %v1058
        %v1109 = vmul.f32 %v1058, %v1108
        %v1110 = vsub.f32 1.0, %v1109
        %v1111 = vmul.f32 %v1108, %v1110
        %v1112 = vadd.f32 %v1108, %v1111
        %vm1113 = vweird.f32 %v1058
        %vm1114 = vweird.f32 %v1108
        %vm1115 = vmor %vm1113, %vm1114
        %v1116 = vsel %vm1115, %v1108, %v1112
        %v1117 = vand.u32 2147483647, %v1058
        %vm1118 = vcmp.eq.f32.partialorder %v1117, 8.507059e+37
        %v1119 = vand.u32 %v1058, 2147483648
        %v1120 = vor.u32 1.1754944e-38, %v1119
        %v1121 = vsel %vm1118, %v1120, %v1116
        %v1122 = vmul.f32 1.0, %v1121
        %v1123 = vrcp.pop %v1059
        %v1124 = vmul.f32 %v1059, %v1123
        %v1125 = vsub.f32 1.0, %v1124
        %v1126 = vmul.f32 %v1123, %v1125
        %v1127 = vadd.f32 %v1123, %v1126
        %vm1128 = vweird.f32 %v1059
        %vm1129 = vweird.f32 %v1123
        %vm1130 = vmor %vm1128, %vm1129
        %v1131 = vsel %vm1130, %v1123, %v1127
        %v1132 = vand.u32 2147483647, %v1059
        %vm1133 = vcmp.eq.f32.partialorder %v1132, 8.507059e+37
        %v1134 = vand.u32 %v1059, 2147483648
        %v1135 = vor.u32 1.1754944e-38, %v1134
        %v1136 = vsel %vm1133, %v1135, %v1131
        %v1137 = vmul.f32 1.0, %v1136
        %v1138 = vrcp.pop %v1060
        %v1139 = vmul.f32 %v1060, %v1138
        %v1140 = vsub.f32 1.0, %v1139
        %v1141 = vmul.f32 %v1138, %v1140
        %v1142 = vadd.f32 %v1138, %v1141
        %vm1143 = vweird.f32 %v1060
        %vm1144 = vweird.f32 %v1138
        %vm1145 = vmor %vm1143, %vm1144
        %v1146 = vsel %vm1145, %v1138, %v1142
        %v1147 = vand.u32 2147483647, %v1060
        %vm1148 = vcmp.eq.f32.partialorder %v1147, 8.507059e+37
        %v1149 = vand.u32 %v1060, 2147483648
        %v1150 = vor.u32 1.1754944e-38, %v1149
        %v1151 = vsel %vm1148, %v1150, %v1146
        %v1152 = vmul.f32 1.0, %v1151
        %v1153 = vrcp.pop %v1061
        %v1154 = vmul.f32 %v1061, %v1153
        %v1155 = vsub.f32 1.0, %v1154
        %v1156 = vmul.f32 %v1153, %v1155
        %v1157 = vadd.f32 %v1153, %v1156
        %vm1158 = vweird.f32 %v1061
        %vm1159 = vweird.f32 %v1153
        %vm1160 = vmor %vm1158, %vm1159
        %v1161 = vsel %vm1160, %v1153, %v1157
        %v1162 = vand.u32 2147483647, %v1061
        %vm1163 = vcmp.eq.f32.partialorder %v1162, 8.507059e+37
        %v1164 = vand.u32 %v1061, 2147483648
        %v1165 = vor.u32 1.1754944e-38, %v1164
        %v1166 = vsel %vm1163, %v1165, %v1161
        %v1167 = vmul.f32 1.0, %v1166
        %v1168 = vrcp.pop %v1062
        %v1169 = vmul.f32 %v1062, %v1168
        %v1170 = vsub.f32 1.0, %v1169
        %v1171 = vmul.f32 %v1168, %v1170
        %v1172 = vadd.f32 %v1168, %v1171
        %vm1173 = vweird.f32 %v1062
        %vm1174 = vweird.f32 %v1168
        %vm1175 = vmor %vm1173, %vm1174
        %v1176 = vsel %vm1175, %v1168, %v1172
        %v1177 = vand.u32 2147483647, %v1062
        %vm1178 = vcmp.eq.f32.partialorder %v1177, 8.507059e+37
        %v1179 = vand.u32 %v1062, 2147483648
        %v1180 = vor.u32 1.1754944e-38, %v1179
        %v1181 = vsel %vm1178, %v1180, %v1176
        %v1182 = vmul.f32 1.0, %v1181
        %1184 = vset.pattern.permute.xlu0 0
        %1185 = vperm.xlu0 %1184, %v1030
        %v1186 = vpop.permute.xlu0 %1185
        %vm1188 = vcmask 261120
        %v1190 = vsel %vm1188, %v1029, 0
        %1192 = vmatpush.msra.mxu0 0.0
        %1193 = vmatpush.msra.mxu0 0.0
        %1194 = vmatpush.msra.mxu0 0.0
        %1195 = vmatpush.msra.mxu0 0.0
        %1196 = vmatpush.msra.mxu0 0.0
        %1197 = vmatpush.msra.mxu0 0.0
        %1198 = vmatpush.msra.mxu0 0.0
        %1199 = vmatpush.msra.mxu0 0.0
        %1200 = vmatpush.msra.mxu0 0.0
        %1201 = vmatpush.msra.mxu0 0.0
        %1202 = vmatpush.msra.mxu0 0.0
        %1203 = vmatpush.msra.mxu0 0.0
        %1204 = vmatpush.msra.mxu0 %v1167
        %1205 = vmatpush.msra.mxu0 %v1137
        %1206 = vmatpush.msra.mxu0 %v1107
        %1207 = vmatpush.msra.mxu0 %v1077
        %1208 = vmatmul.f32.gmra.mxu0 %v1190
        %v1209 = vpop.f32.mrf.mxu0
        %v1210 = vadd.f32 %v1186, %v1209
        %1211 = vdwg.mxu0
        %1212 = vmatpush.msra.mxu0 0.0
        %1213 = vmatpush.msra.mxu0 0.0
        %1214 = vmatpush.msra.mxu0 0.0
        %1215 = vmatpush.msra.mxu0 0.0
        %1216 = vmatpush.msra.mxu0 0.0
        %1217 = vmatpush.msra.mxu0 0.0
        %1218 = vmatpush.msra.mxu0 0.0
        %1219 = vmatpush.msra.mxu0 0.0
        %1220 = vmatpush.msra.mxu0 0.0
        %1221 = vmatpush.msra.mxu0 0.0
        %1222 = vmatpush.msra.mxu0 0.0
        %1223 = vmatpush.msra.mxu0 0.0
        %1224 = vmatpush.msra.mxu0 %v1182
        %1225 = vmatpush.msra.mxu0 %v1152
        %1226 = vmatpush.msra.mxu0 %v1122
        %1227 = vmatpush.msra.mxu0 %v1092
        %1228 = vmatmul.f32.gmra.mxu0 %v1190
        %v1229 = vpop.f32.mrf.mxu0
        %v1230 = vadd.f32 %v1186, %v1229
        %1231 = vdwg.mxu0
        %v1234 = vrot.slane %v1230, 4
        %vm1235 = vcmask 1043456
        %v1236 = vsel %vm1235, %v1210, %v1234
        %1238 = vst [vmem:[%s272] sm:$0xff] %v1236
        %s1239 = sand.u32 %s181, 1
        %s1240 = scalar_lea.sflag [#allocation3], %s1239
        %s1241 = sand.u32 %s181, 1
        %s1242 = smul.addr %s1241, 8
        %s1243 = scalar_lea.vmem [#allocation2], %s1242
        // Predicated region
        $region49: #{tpu_custom_call.1} parent=47 // pred_check
          %p1244 = pneg %p191
        $region50: #{tpu_custom_call.1} parent=47 // pred_check_branch
          %1246 = sbr.rel (%p1244) target = $region52
        $region51: #{tpu_custom_call.1} parent=47 // pred_region
          %s1247 = smul.u32 2, %s21
          %1249 = vsyncadd %s1240, 0
          %s1250 = smul.addr %s1247, 4
          %s1251 = scalar_lea.hbm %s7, %s1250
          %s1253 = sshll.u32 %s1243, 4
          %s1254 = int_to_ptr.vmem [resolvable:$true] %s1253
          %s1255 = sshll.u32 %s1251, 4
          %s1256 = int_to_ptr.hbm [resolvable:$true] %s1255
          %1258 = dma.vmem_to_hbm [thread:$0]  %s1254, 128, %s1256, %s1240
        $region52: #{tpu_custom_call.1} parent=47 // pred_fallthru
          _
      $region48: #{tpu_custom_call.1} parent=5 // pred_fallthru
        _
      %p1259 = scmp.le.s32.totalorder 2, %s16
      // Predicated region
      $region53: #{tpu_custom_call.1} parent=5 // pred_check
        %p1260 = pneg %p1259
      $region54: #{tpu_custom_call.1} parent=5 // pred_check_branch
        %1262 = sbr.rel (%p1260) target = $region56
      $region55: #{tpu_custom_call.1} parent=5 // pred_region
        %s1263 = ssub.s32 %s16, 2
        // Predicated region
        $region57: #{tpu_custom_call.1} parent=55 // pred_check
          %p1264 = pneg %p197
        $region58: #{tpu_custom_call.1} parent=55 // pred_check_branch
          %1266 = sbr.rel (%p1264) target = $region60
        $region59: #{tpu_custom_call.1} parent=55 // pred_region
          %s1267 = sand.u32 %s182, 1
          %s1268 = scalar_lea.sflag [#allocation3], %s1267
          %s1269 = sand.u32 %s182, 1
          %s1270 = smul.addr %s1269, 8
          %s1271 = scalar_lea.vmem [#allocation2], %s1270
          %1273 = dma.done %s1268, 128
        $region60: #{tpu_custom_call.1} parent=55 // pred_fallthru
          _
      $region56: #{tpu_custom_call.1} parent=5 // pred_fallthru
        _
    $region6: #{tpu_custom_call.1} parent=1 // loop_footer
      %s20 = sadd.s32 1, %s16
    $region7: #{tpu_custom_call.1} parent=1 // loop_footer_branch
      %15 = sbr.rel target = $region3
    $region8: #{tpu_custom_call.1} parent=1 // loop_exit
      _
    %1274 = vsyncpa [#allocation3], 1
    %s1275 = scalar_lea.sflag [#allocation3], 1
    %1276 = vsyncpa %s1275, 1

</llo_original>
